<compile_context>
chip_gen: v7x
topology: tpu7x:2x2x1
jax: 0.10.0
libtpu: 0.0.40
codegen_flags: <defaults>
</compile_context>

<pallas_src>
import jax
import jax.numpy as jnp
from jax.experimental import pallas as pl
from jax.experimental.pallas import tpu as pltpu

LANE = 128
SUBLANE = 8
TARGET_TILE_BYTES = 4 * 1024 * 1024   # per-buffer tile; 2 bufs x (in+out) < 32 MiB
MAX_LANE_WIDTH = 16384                # cap on the lane-dense last dim (elements)


def _copy_kernel(x_ref, o_ref):
    # Hot path: plain VMEM load + store of the current tile.
    o_ref[...] = x_ref[...]


def _pallas_copy_2d(x2d):
    """Copy an (R, W) array (W a multiple of 128, or R == 1) through Pallas."""
    R, W = x2d.shape
    itemsize = x2d.dtype.itemsize

    # Pick tile rows so one tile is ~TARGET_TILE_BYTES; either a multiple of 8
    # or the full row extent (both satisfy the (8, 128) block constraint).
    tr = max(1, TARGET_TILE_BYTES // (W * itemsize))
    if tr >= R:
        tr = R
    else:
        tr = max(SUBLANE, (tr // SUBLANE) * SUBLANE)

    grid = (pl.cdiv(R, tr),)
    return pl.pallas_call(
        _copy_kernel,
        out_shape=jax.ShapeDtypeStruct((R, W), x2d.dtype),
        grid=grid,
        in_specs=[pl.BlockSpec((tr, W), lambda i: (i, 0))],
        out_specs=pl.BlockSpec((tr, W), lambda i: (i, 0)),
        compiler_params=pltpu.CompilerParams(
            dimension_semantics=("parallel",),      # shards across v7x's 2 TCs
            vmem_limit_bytes=32 * 1024 * 1024,      # safe on v5e/v6e/v7x
        ),
        cost_estimate=pl.CostEstimate(
            flops=0, transcendentals=0, bytes_accessed=2 * R * W * itemsize),
    )(x2d)


def knn_model_forward(x):
    """JAX/Pallas equivalent of KNNModel.forward: output = input (identity)."""
    orig_shape = x.shape
    orig_dtype = x.dtype
    n = x.size
    if n == 0:
        return x

    flat = x.reshape(-1)

    # Dtype-aware packing: view sub-32-bit payloads as uint32 so the copy uses
    # fully-packed vregs (no masked sublane stores), with zero data movement.
    itemsize = orig_dtype.itemsize
    packed = (itemsize in (1, 2)
              and orig_dtype != jnp.bool_
              and (n * itemsize) % 4 == 0)
    if packed:
        per = 4 // itemsize
        work = jax.lax.bitcast_convert_type(flat.reshape(-1, per), jnp.uint32)
    else:
        work = flat
    m = work.shape[0]

    if m % LANE == 0:
        # Aligned path (typical activations): no padding, no extra HBM copies.
        # Choose the widest lane-dense last dim (multiple of 128) dividing m.
        groups = m // LANE
        max_groups = MAX_LANE_WIDTH // LANE
        wg = 1
        for g in range(min(groups, max_groups), 0, -1):
            if groups % g == 0:
                wg = g
                break
        W = wg * LANE
        y2d = _pallas_copy_2d(work.reshape(m // W, W))
        y_work = y2d.reshape(-1)
    else:
        # Rare ragged fallback: pad the tail up to one (8,128) granule, copy,
        # then strip. Only the tail padding is wasted traffic.
        # TODO(synk): replace pad/strip with a masked final block if this
        # ragged path ever becomes hot.
        pad = (-m) % (SUBLANE * LANE)
        padded = jnp.concatenate([work, jnp.zeros((pad,), dtype=work.dtype)])
        y2d = _pallas_copy_2d(padded.reshape(-1, LANE))
        y_work = y2d.reshape(-1)[:m]

    if packed:
        y_flat = jax.lax.bitcast_convert_type(y_work, orig_dtype).reshape(-1)
    else:
        y_flat = y_work
    return y_flat.reshape(orig_shape)


if __name__ == "__main__":
    key = jax.random.PRNGKey(0)
    # KNNModel has no parameters; it only applies identity to its input (NCHW).
    x = jax.random.normal(key, (2, 4, 16, 16), dtype=jnp.float32)

    y = knn_model_forward(x)
    jax.block_until_ready(y)

    assert y.shape == x.shape and y.dtype == x.dtype
    assert jnp.array_equal(y, x)
    print("KERNEL_OK")
</pallas_src>

<mosaic_0001>
module attributes {stable_mosaic.version = 11 : i64} {
  func.func @_copy_kernel(%arg0: i32, %arg1: memref<1x2048xf32, #tpu.memory_space<vmem>>, %arg2: memref<1x2048xf32, #tpu.memory_space<vmem>>) attributes {dimension_semantics = [#tpu.dimension_semantics<parallel>], iteration_bounds = array<i64: 1>, scalar_prefetch = 0 : i64, scratch_operands = 0 : i64, tpu.core_type = #tpu.core_type<tc>, window_params = [{transform_indices = @transform_0, window_bounds = array<i64: 1, 2048>}, {transform_indices = @transform_1, window_bounds = array<i64: 1, 2048>}]} {
    %c0 = arith.constant 0 : index
    %c0_0 = arith.constant 0 : index
    %0 = vector.load %arg1[%c0, %c0_0] : memref<1x2048xf32, #tpu.memory_space<vmem>>, vector<1x2048xf32>
    %c0_1 = arith.constant 0 : index
    %c0_2 = arith.constant 0 : index
    %1 = vector.load %arg2[%c0_1, %c0_2] : memref<1x2048xf32, #tpu.memory_space<vmem>>, vector<1x2048xf32>
    tpu.vector_store %arg2[%c0_1, %c0_2], %0 {strides = array<i32>} : memref<1x2048xf32, #tpu.memory_space<vmem>>, vector<1x2048xf32>,
    return
  }
  func.func @transform_0(%arg0: i32) -> (i32, i32) {
    %c0_i32 = arith.constant 0 : i32
    %c0_i32_0 = arith.constant 0 : i32
    return %arg0, %c0_i32 : i32, i32
  }
  func.func @transform_1(%arg0: i32) -> (i32, i32) {
    %c0_i32 = arith.constant 0 : i32
    %c0_i32_0 = arith.constant 0 : i32
    return %arg0, %c0_i32 : i32, i32
  }
}

</mosaic_0001>

<llo_original>
// kernel: tpu_custom_call.1
$region0: #{tpu_custom_call.1}
  #allocation0 [shape = 'u32[]', space=smem, size = 0x4, offset = 0x4, fixed_abs, tag = 'smem constant byte address 0x4 - core index']
  #allocation1 [shape = 'u32[144,128]{1,0:T(1,128)}', space=vmem, size = 0x12000, scoped, tag = 'internal scratch']
  %s0 = inlined_call_operand.hbm [shape: f32[1,2048], index: 0, kind: input, shape index: {}]
  %s1 = inlined_call_operand.hbm [shape: f32[1,2048], index: 1, kind: output, shape index: {}]
  %s2 = sld [smem:[#allocation0]]
  $region18: #{tpu_custom_call.1} parent=0
    _
  %s4 = ssub.s32 1, %s2
  %s5 = scalar_select 0, %s4, %s2
  $region1: #{tpu_custom_call.1} parent=0
    #allocation2 [shape = 'u8[8192]{0}', space=vmem, size = 0x2000, scoped, tag = 'input window, operand 0, single buffered']
    #allocation3 [shape = 's32[1]{0}', space=sflag, size = 0x4, scoped, tag = 'scoped memory for tpu_custom_call.1']
    #allocation4 [shape = 's32[1]{0}', space=sflag, size = 0x4, scoped, tag = 'scoped memory for tpu_custom_call.1']
    #allocation5 [shape = 'u8[8192]{0}', space=vmem, size = 0x2000, scoped, tag = 'output window, operand 0, single buffered']
    %6 = vsyncpa [#allocation3], 0
    %7 = vsyncpa [#allocation4], 0
    // Predicated region
    $region2: #{tpu_custom_call.1} parent=1 // pred_check
      _
    $region3: #{tpu_custom_call.1} parent=1 // pred_check_branch
      %9 = sbr.rel (0) target = $region5
    $region4: #{tpu_custom_call.1} parent=1 // pred_region
      %s11 = ssub.s32 256, 256
      %12 = vsyncadd [#allocation3], %s11
      %s14 = sshll.u32 [#allocation2], 4
      %s15 = int_to_ptr.vmem [resolvable:$true] %s14
      %17 = dma.hbm_to_vmem [thread:$0]  %s0, 256, %s15, [#allocation3]
    $region5: #{tpu_custom_call.1} parent=1 // pred_fallthru
      _
    // Predicated region
    $region6: #{tpu_custom_call.1} parent=1 // pred_check
      _
    $region7: #{tpu_custom_call.1} parent=1 // pred_check_branch
      %19 = sbr.rel (0) target = $region9
    $region8: #{tpu_custom_call.1} parent=1 // pred_region
      %20 = dma.done [#allocation3], 256
    $region9: #{tpu_custom_call.1} parent=1 // pred_fallthru
      _
    %v21 = vld [vmem:[#allocation2] sm:$0xff]
    %v22 = vld [vmem:[#allocation2 + $0x8] sm:$0xff]
    %23 = vst [vmem:[#allocation5] sm:$0xff] %v21
    %24 = vst [vmem:[#allocation5 + $0x8] sm:$0xff] %v22
    // Predicated region
    $region10: #{tpu_custom_call.1} parent=1 // pred_check
      _
    $region11: #{tpu_custom_call.1} parent=1 // pred_check_branch
      %26 = sbr.rel (0) target = $region13
    $region12: #{tpu_custom_call.1} parent=1 // pred_region
      %s28 = ssub.s32 256, 256
      %29 = vsyncadd [#allocation4], %s28
      %s31 = sshll.u32 [#allocation5], 4
      %s32 = int_to_ptr.vmem [resolvable:$true] %s31
      %34 = dma.vmem_to_hbm [thread:$0]  %s32, 256, %s1, [#allocation4]
    $region13: #{tpu_custom_call.1} parent=1 // pred_fallthru
      _
    // Predicated region
    $region14: #{tpu_custom_call.1} parent=1 // pred_check
      _
    $region15: #{tpu_custom_call.1} parent=1 // pred_check_branch
      %36 = sbr.rel (0) target = $region17
    $region16: #{tpu_custom_call.1} parent=1 // pred_region
      %37 = dma.done [#allocation4], 256
    $region17: #{tpu_custom_call.1} parent=1 // pred_fallthru
      _
    %38 = vsyncpa [#allocation3], 1
    %39 = vsyncpa [#allocation4], 1

</llo_original>
